<compile_context>
chip_gen: v5e
topology: v5e:2x2
jax: 0.10.0
libtpu: 0.0.40
codegen_flags: <defaults>
</compile_context>

<pallas_src>
import math
import jax
import jax.numpy as jnp
from jax.experimental import pallas as pl
from jax.experimental.pallas import tpu as pltpu


def _round_up(n, m):
    return ((n + m - 1) // m) * m


def mlp_kernel(x_ref, w1_ref, b1_ref, w2_ref, b2_ref, o_ref):
    # x_ref, w1_ref, w2_ref are bf16; biases + accumulation + epilogue in f32.
    x = x_ref[...]                                               # (TB, 784) bf16
    h = jnp.dot(x, w1_ref[...], preferred_element_type=jnp.float32)   # (TB, 256) f32
    h = jnp.maximum(h + b1_ref[...], 0.0)                        # bias + ReLU in f32
    y = jnp.dot(h.astype(jnp.bfloat16), w2_ref[...],
                preferred_element_type=jnp.float32)              # (TB, 128) f32
    o_ref[...] = (y + b2_ref[...]).astype(o_ref.dtype)


def mlp_forward(x, w1, b1, w2, b2, *, batch_tile=512):
    """x: (B, 1, 28, 28) or (B, 784) float32 -> logits (B, 10) float32.

    w1: (784, 200), b1: (200,), w2: (200, 10), b2: (10,)  -- same math as
    torch Flatten -> Linear(784,200) -> ReLU -> Linear(200,10).
    """
    B = x.shape[0]
    x2 = x.reshape(B, -1)                         # flatten (row-major, matches torch)
    in_dim = x2.shape[1]                          # 784
    hid = w1.shape[1]                             # 200
    out_dim = w2.shape[1]                         # 10

    HID_P = _round_up(hid, 128)                   # 256
    OUT_P = _round_up(out_dim, 128)               # 128

    # --- lane-dense, bf16 weight prep (zero padding keeps numerics exact) ---
    w1p = jnp.zeros((in_dim, HID_P), jnp.bfloat16).at[:, :hid].set(
        w1.astype(jnp.bfloat16))
    b1p = jnp.zeros((1, HID_P), jnp.float32).at[:, :hid].set(
        b1.reshape(1, hid).astype(jnp.float32))
    w2p = jnp.zeros((HID_P, OUT_P), jnp.bfloat16).at[:hid, :out_dim].set(
        w2.astype(jnp.bfloat16))
    b2p = jnp.zeros((1, OUT_P), jnp.float32).at[:, :out_dim].set(
        b2.reshape(1, out_dim).astype(jnp.float32))

    # --- batch tiling: pad to >= 8 sublanes, tile large batches over a grid ---
    if B >= batch_tile:
        tb = batch_tile
    else:
        tb = _round_up(B, 8)
    Bp = _round_up(B, tb)
    xp = jnp.zeros((Bp, in_dim), jnp.bfloat16).at[:B, :].set(
        x2.astype(jnp.bfloat16))

    grid = (Bp // tb,)

    out_padded = pl.pallas_call(
        mlp_kernel,
        out_shape=jax.ShapeDtypeStruct((Bp, OUT_P), jnp.float32),
        grid_spec=pl.GridSpec(
            grid=grid,
            in_specs=[
                pl.BlockSpec((tb, in_dim), lambda i: (i, 0)),      # x tile
                pl.BlockSpec((in_dim, HID_P), lambda i: (0, 0)),   # w1 (resident)
                pl.BlockSpec((1, HID_P), lambda i: (0, 0)),        # b1 (resident)
                pl.BlockSpec((HID_P, OUT_P), lambda i: (0, 0)),    # w2 (resident)
                pl.BlockSpec((1, OUT_P), lambda i: (0, 0)),        # b2 (resident)
            ],
            out_specs=pl.BlockSpec((tb, OUT_P), lambda i: (i, 0)),
        ),
        compiler_params=pltpu.CompilerParams(
            dimension_semantics=("parallel",)),                    # 2-TC shard on v7x
    )(xp, w1p, b1p, w2p, b2p)

    # Slice padding back off outside the kernel.
    return out_padded[:B, :out_dim]


def init_params(key):
    """Deterministic init mirroring nn.Linear's uniform(-1/sqrt(fan_in), 1/sqrt(fan_in))."""
    k1, k2, k3, k4 = jax.random.split(key, 4)
    in_dim, hid, out_dim = 28 * 28, 200, 10
    bound1 = 1.0 / math.sqrt(in_dim)
    bound2 = 1.0 / math.sqrt(hid)
    w1 = jax.random.uniform(k1, (in_dim, hid), jnp.float32, -bound1, bound1)
    b1 = jax.random.uniform(k2, (hid,), jnp.float32, -bound1, bound1)
    w2 = jax.random.uniform(k3, (hid, out_dim), jnp.float32, -bound2, bound2)
    b2 = jax.random.uniform(k4, (out_dim,), jnp.float32, -bound2, bound2)
    return w1, b1, w2, b2


if __name__ == "__main__":
    key = jax.random.PRNGKey(0)
    kx, kp = jax.random.split(key)
    # MNIST-like input: batch=2, 1 channel, 28x28 spatial
    x = jax.random.normal(kx, (2, 1, 28, 28), jnp.float32)
    w1, b1, w2, b2 = init_params(kp)

    logits = mlp_forward(x, w1, b1, w2, b2)
    logits = jax.block_until_ready(logits)

    # Correctness check against pure-JAX f32 reference (bf16 weights -> looser tol).
    xf = x.reshape(x.shape[0], -1)
    ref = jnp.maximum(xf @ w1 + b1, 0.0) @ w2 + b2
    assert logits.shape == (2, 10)
    assert jnp.allclose(logits, ref, atol=5e-2, rtol=5e-2), (
        jnp.max(jnp.abs(logits - ref)))

    print("KERNEL_OK")
</pallas_src>

<mosaic_0001>
module attributes {stable_mosaic.version = 11 : i64} {
  func.func @mlp_kernel(%arg0: i32, %arg1: memref<8x784xbf16, #tpu.memory_space<vmem>>, %arg2: memref<784x256xbf16, #tpu.memory_space<vmem>>, %arg3: memref<1x256xf32, #tpu.memory_space<vmem>>, %arg4: memref<256x128xbf16, #tpu.memory_space<vmem>>, %arg5: memref<1x128xf32, #tpu.memory_space<vmem>>, %arg6: memref<8x128xf32, #tpu.memory_space<vmem>>) attributes {dimension_semantics = [#tpu.dimension_semantics<parallel>], iteration_bounds = array<i64: 1>, scalar_prefetch = 0 : i64, scratch_operands = 0 : i64, tpu.core_type = #tpu.core_type<tc>, window_params = [{transform_indices = @transform_0, window_bounds = array<i64: 8, 784>}, {pipeline_mode = #tpu.pipeline_mode<synchronous>, transform_indices = @transform_1, window_bounds = array<i64: 784, 256>}, {pipeline_mode = #tpu.pipeline_mode<synchronous>, transform_indices = @transform_2, window_bounds = array<i64: 1, 256>}, {pipeline_mode = #tpu.pipeline_mode<synchronous>, transform_indices = @transform_3, window_bounds = array<i64: 256, 128>}, {pipeline_mode = #tpu.pipeline_mode<synchronous>, transform_indices = @transform_4, window_bounds = array<i64: 1, 128>}, {transform_indices = @transform_5, window_bounds = array<i64: 8, 128>}]} {
    %c0 = arith.constant 0 : index
    %c0_0 = arith.constant 0 : index
    %0 = vector.load %arg1[%c0, %c0_0] : memref<8x784xbf16, #tpu.memory_space<vmem>>, vector<8x784xbf16>
    %c0_1 = arith.constant 0 : index
    %c0_2 = arith.constant 0 : index
    %1 = vector.load %arg2[%c0_1, %c0_2] : memref<784x256xbf16, #tpu.memory_space<vmem>>, vector<784x256xbf16>
    %cst = arith.constant dense<0.000000e+00> : vector<8x256xf32>
    %2 = tpu.matmul %0, %1, %cst {dimension_numbers = #tpu.dot_dimension_numbers<[1], [0], [0], [1], [0, 0, 1, 1], [], []>} : vector<8x784xbf16>, vector<784x256xbf16>, vector<8x256xf32> -> vector<8x256xf32>
    %c0_3 = arith.constant 0 : index
    %c0_4 = arith.constant 0 : index
    %3 = vector.load %arg3[%c0_3, %c0_4] : memref<1x256xf32, #tpu.memory_space<vmem>>, vector<1x256xf32>
    %4 = vector.broadcast %3 : vector<1x256xf32> to vector<8x256xf32>
    %5 = arith.addf %2, %4 : vector<8x256xf32>
    %cst_5 = arith.constant 0.000000e+00 : f32
    %6 = vector.broadcast %cst_5 : f32 to vector<8x256xf32>
    %7 = arith.maximumf %5, %6 : vector<8x256xf32>
    %8 = arith.truncf %7 : vector<8x256xf32> to vector<8x256xbf16>
    %c0_6 = arith.constant 0 : index
    %c0_7 = arith.constant 0 : index
    %9 = vector.load %arg4[%c0_6, %c0_7] : memref<256x128xbf16, #tpu.memory_space<vmem>>, vector<256x128xbf16>
    %cst_8 = arith.constant dense<0.000000e+00> : vector<8x128xf32>
    %10 = tpu.matmul %8, %9, %cst_8 {dimension_numbers = #tpu.dot_dimension_numbers<[1], [0], [0], [1], [0, 0, 1, 1], [], []>} : vector<8x256xbf16>, vector<256x128xbf16>, vector<8x128xf32> -> vector<8x128xf32>
    %c0_9 = arith.constant 0 : index
    %c0_10 = arith.constant 0 : index
    %11 = vector.load %arg5[%c0_9, %c0_10] : memref<1x128xf32, #tpu.memory_space<vmem>>, vector<1x128xf32>
    %12 = vector.broadcast %11 : vector<1x128xf32> to vector<8x128xf32>
    %13 = arith.addf %10, %12 : vector<8x128xf32>
    %c0_11 = arith.constant 0 : index
    %c0_12 = arith.constant 0 : index
    %14 = vector.load %arg6[%c0_11, %c0_12] : memref<8x128xf32, #tpu.memory_space<vmem>>, vector<8x128xf32>
    tpu.vector_store %arg6[%c0_11, %c0_12], %13 {strides = array<i32>} : memref<8x128xf32, #tpu.memory_space<vmem>>, vector<8x128xf32>,
    return
  }
  func.func @transform_0(%arg0: i32) -> (i32, i32) {
    %c0_i32 = arith.constant 0 : i32
    %c0_i32_0 = arith.constant 0 : i32
    return %arg0, %c0_i32 : i32, i32
  }
  func.func @transform_1(%arg0: i32) -> (i32, i32) {
    %c0_i32 = arith.constant 0 : i32
    %c0_i32_0 = arith.constant 0 : i32
    %c0_i32_1 = arith.constant 0 : i32
    return %c0_i32, %c0_i32_0 : i32, i32
  }
  func.func @transform_2(%arg0: i32) -> (i32, i32) {
    %c0_i32 = arith.constant 0 : i32
    %c0_i32_0 = arith.constant 0 : i32
    %c0_i32_1 = arith.constant 0 : i32
    return %c0_i32, %c0_i32_0 : i32, i32
  }
  func.func @transform_3(%arg0: i32) -> (i32, i32) {
    %c0_i32 = arith.constant 0 : i32
    %c0_i32_0 = arith.constant 0 : i32
    %c0_i32_1 = arith.constant 0 : i32
    return %c0_i32, %c0_i32_0 : i32, i32
  }
  func.func @transform_4(%arg0: i32) -> (i32, i32) {
    %c0_i32 = arith.constant 0 : i32
    %c0_i32_0 = arith.constant 0 : i32
    %c0_i32_1 = arith.constant 0 : i32
    return %c0_i32, %c0_i32_0 : i32, i32
  }
  func.func @transform_5(%arg0: i32) -> (i32, i32) {
    %c0_i32 = arith.constant 0 : i32
    %c0_i32_0 = arith.constant 0 : i32
    return %arg0, %c0_i32 : i32, i32
  }
}

</mosaic_0001>

<llo_original>
// kernel: tpu_custom_call.1
$region0: #{tpu_custom_call.1}
  #allocation0 [shape = 'u32[]', space=smem, size = 0x4, offset = 0x4, fixed_abs, tag = 'smem constant byte address 0x4 - core index']
  #allocation1 [shape = 'u32[72,128]{1,0:T(1,128)}', space=vmem, size = 0x9000, scoped, tag = 'internal scratch']
  %s0 = inlined_call_operand.hbm [shape: bf16[8,784], index: 0, kind: input, shape index: {}]
  %s1 = inlined_call_operand.hbm [shape: bf16[784,256], index: 1, kind: input, shape index: {}]
  %s2 = inlined_call_operand.hbm [shape: f32[1,256], index: 2, kind: input, shape index: {}]
  %s3 = inlined_call_operand.hbm [shape: bf16[256,128], index: 3, kind: input, shape index: {}]
  %s4 = inlined_call_operand.vmem [shape: f32[1,128], index: 4, kind: input, shape index: {}]
  %s5 = inlined_call_operand.hbm [shape: f32[8,128], index: 5, kind: output, shape index: {}]
  %s6 = sld [smem:[#allocation0]]
  $region46: #{tpu_custom_call.1} parent=0
    _
  %s8 = ssub.s32 1, %s6
  %s9 = scalar_select 0, %s8, %s6
  $region1: #{tpu_custom_call.1} parent=0
    #allocation2 [shape = 'u8[14336]{0}', space=vmem, size = 0x3800, scoped, tag = 'input window, operand 0, single buffered']
    #allocation3 [shape = 's32[1]{0}', space=sflag, size = 0x4, scoped, tag = 'scoped memory for tpu_custom_call.1']
    #allocation4 [shape = 's32[1]{0}', space=sflag, size = 0x4, scoped, tag = 'scoped memory for tpu_custom_call.1']
    #allocation5 [shape = 'u8[401408]{0}', space=vmem, size = 0x62000, scoped, tag = 'input window, operand 1, single buffered']
    #allocation6 [shape = 's32[1]{0}', space=sflag, size = 0x4, scoped, tag = 'scoped memory for tpu_custom_call.1']
    #allocation7 [shape = 'u8[1024]{0}', space=vmem, size = 0x400, scoped, tag = 'input window, operand 2, single buffered']
    #allocation8 [shape = 'u8[65536]{0}', space=vmem, size = 0x10000, scoped, tag = 'input window, operand 3, single buffered']
    #allocation9 [shape = 's32[1]{0}', space=sflag, size = 0x4, scoped, tag = 'scoped memory for tpu_custom_call.1']
    #allocation10 [shape = 'u8[4096]{0}', space=vmem, size = 0x1000, scoped, tag = 'output window, operand 0, single buffered']
    %10 = vsyncpa [#allocation3], 0
    %11 = vsyncpa [#allocation6], 0
    %12 = vsyncpa [#allocation9], 0
    %13 = vsyncpa [#allocation4], 0
    // Predicated region
    $region2: #{tpu_custom_call.1} parent=1 // pred_check
      _
    $region3: #{tpu_custom_call.1} parent=1 // pred_check_branch
      %15 = sbr.rel (0) target = $region5
    $region4: #{tpu_custom_call.1} parent=1 // pred_region
      %17 = vsyncadd [#allocation3], 0
      %s19 = sshll.u32 %s0, 4
      %s20 = int_to_ptr.hbm [resolvable:$true] %s19
      %s21 = sshll.u32 [#allocation2], 4
      %s22 = int_to_ptr.vmem [resolvable:$true] %s21
      %24 = dma.hbm_to_vmem [thread:$0]  %s20, 448, %s22, [#allocation3]
    $region5: #{tpu_custom_call.1} parent=1 // pred_fallthru
      _
    // Predicated region
    $region6: #{tpu_custom_call.1} parent=1 // pred_check
      _
    $region7: #{tpu_custom_call.1} parent=1 // pred_check_branch
      %26 = sbr.rel (0) target = $region9
    $region8: #{tpu_custom_call.1} parent=1 // pred_region
      %28 = vsyncadd [#allocation6], 0
      %s29 = sshll.u32 %s1, 4
      %s30 = int_to_ptr.hbm [resolvable:$true] %s29
      %s31 = sshll.u32 [#allocation5], 4
      %s32 = int_to_ptr.vmem [resolvable:$true] %s31
      %37 = dma.hbm_to_vmem [thread:$0]  %s30, 12544, %s32, [#allocation6], 128, 128, 8
    $region9: #{tpu_custom_call.1} parent=1 // pred_fallthru
      _
    // Predicated region
    $region10: #{tpu_custom_call.1} parent=1 // pred_check
      _
    $region11: #{tpu_custom_call.1} parent=1 // pred_check_branch
      %39 = sbr.rel (0) target = $region13
    $region12: #{tpu_custom_call.1} parent=1 // pred_region
      %41 = vsyncadd [#allocation6], 0
      %s43 = sshll.u32 %s2, 4
      %s44 = int_to_ptr.hbm [resolvable:$true] %s43
      %s45 = sshll.u32 [#allocation7], 4
      %s46 = int_to_ptr.vmem [resolvable:$true] %s45
      %48 = dma.hbm_to_vmem [thread:$0]  %s44, 32, %s46, [#allocation6]
    $region13: #{tpu_custom_call.1} parent=1 // pred_fallthru
      _
    // Predicated region
    $region14: #{tpu_custom_call.1} parent=1 // pred_check
      _
    $region15: #{tpu_custom_call.1} parent=1 // pred_check_branch
      %50 = sbr.rel (0) target = $region17
    $region16: #{tpu_custom_call.1} parent=1 // pred_region
      %52 = vsyncadd [#allocation9], 0
      %s53 = sshll.u32 %s3, 4
      %s54 = int_to_ptr.hbm [resolvable:$true] %s53
      %s55 = sshll.u32 [#allocation8], 4
      %s56 = int_to_ptr.vmem [resolvable:$true] %s55
      %61 = dma.hbm_to_vmem [thread:$0]  %s54, 2048, %s56, [#allocation9], 64, 64, 4
    $region17: #{tpu_custom_call.1} parent=1 // pred_fallthru
      _
    // Predicated region
    $region18: #{tpu_custom_call.1} parent=1 // pred_check
      _
    $region19: #{tpu_custom_call.1} parent=1 // pred_check_branch
      %63 = sbr.rel (0) target = $region21
    $region20: #{tpu_custom_call.1} parent=1 // pred_region
      _
    $region21: #{tpu_custom_call.1} parent=1 // pred_fallthru
      _
    // Predicated region
    $region22: #{tpu_custom_call.1} parent=1 // pred_check
      _
    $region23: #{tpu_custom_call.1} parent=1 // pred_check_branch
      %65 = sbr.rel (0) target = $region25
    $region24: #{tpu_custom_call.1} parent=1 // pred_region
      %67 = dma.done [#allocation3], 448
    $region25: #{tpu_custom_call.1} parent=1 // pred_fallthru
      _
    // Predicated region
    $region26: #{tpu_custom_call.1} parent=1 // pred_check
      _
    $region27: #{tpu_custom_call.1} parent=1 // pred_check_branch
      %69 = sbr.rel (0) target = $region29
    $region28: #{tpu_custom_call.1} parent=1 // pred_region
      %71 = dma.done [#allocation6], 12544
    $region29: #{tpu_custom_call.1} parent=1 // pred_fallthru
      _
    // Predicated region
    $region30: #{tpu_custom_call.1} parent=1 // pred_check
      _
    $region31: #{tpu_custom_call.1} parent=1 // pred_check_branch
      %73 = sbr.rel (0) target = $region33
    $region32: #{tpu_custom_call.1} parent=1 // pred_region
      %75 = dma.done [#allocation6], 32
    $region33: #{tpu_custom_call.1} parent=1 // pred_fallthru
      _
    // Predicated region
    $region34: #{tpu_custom_call.1} parent=1 // pred_check
      _
    $region35: #{tpu_custom_call.1} parent=1 // pred_check_branch
      %77 = sbr.rel (0) target = $region37
    $region36: #{tpu_custom_call.1} parent=1 // pred_region
      %79 = dma.done [#allocation9], 2048
    $region37: #{tpu_custom_call.1} parent=1 // pred_fallthru
      _
    %v81 = vld [vmem:[#allocation2] sm:$0xff]
    %v82 = vld [vmem:[#allocation2 + $0x8] sm:$0xff]
    %v83 = vld [vmem:[#allocation2 + $0x10] sm:$0xff]
    %v84 = vld [vmem:[#allocation2 + $0x18] sm:$0xf]
    %v85 = vld [vmem:[#allocation5] sm:$0xff]
    %v86 = vld [vmem:[#allocation5 + $0x8] sm:$0xff]
    %v87 = vld [vmem:[#allocation5 + $0x10] sm:$0xff]
    %v88 = vld [vmem:[#allocation5 + $0x18] sm:$0xff]
    %v89 = vld [vmem:[#allocation5 + $0x20] sm:$0xff]
    %v90 = vld [vmem:[#allocation5 + $0x28] sm:$0xff]
    %v91 = vld [vmem:[#allocation5 + $0x30] sm:$0xff]
    %v92 = vld [vmem:[#allocation5 + $0x38] sm:$0xff]
    %v93 = vld [vmem:[#allocation5 + $0x40] sm:$0xff]
    %v94 = vld [vmem:[#allocation5 + $0x48] sm:$0xff]
    %v95 = vld [vmem:[#allocation5 + $0x50] sm:$0xff]
    %v96 = vld [vmem:[#allocation5 + $0x58] sm:$0xff]
    %v97 = vld [vmem:[#allocation5 + $0x60] sm:$0xff]
    %v98 = vld [vmem:[#allocation5 + $0x68] sm:$0xff]
    %v99 = vld [vmem:[#allocation5 + $0x70] sm:$0xff]
    %v100 = vld [vmem:[#allocation5 + $0x78] sm:$0xff]
    %v101 = vld [vmem:[#allocation5 + $0x80] sm:$0xff]
    %v102 = vld [vmem:[#allocation5 + $0x88] sm:$0xff]
    %v103 = vld [vmem:[#allocation5 + $0x90] sm:$0xff]
    %v104 = vld [vmem:[#allocation5 + $0x98] sm:$0xff]
    %v105 = vld [vmem:[#allocation5 + $0xa0] sm:$0xff]
    %v106 = vld [vmem:[#allocation5 + $0xa8] sm:$0xff]
    %v107 = vld [vmem:[#allocation5 + $0xb0] sm:$0xff]
    %v108 = vld [vmem:[#allocation5 + $0xb8] sm:$0xff]
    %v109 = vld [vmem:[#allocation5 + $0xc0] sm:$0xff]
    %v110 = vld [vmem:[#allocation5 + $0xc8] sm:$0xff]
    %v111 = vld [vmem:[#allocation5 + $0xd0] sm:$0xff]
    %v112 = vld [vmem:[#allocation5 + $0xd8] sm:$0xff]
    %v113 = vld [vmem:[#allocation5 + $0xe0] sm:$0xff]
    %v114 = vld [vmem:[#allocation5 + $0xe8] sm:$0xff]
    %v115 = vld [vmem:[#allocation5 + $0xf0] sm:$0xff]
    %v116 = vld [vmem:[#allocation5 + $0xf8] sm:$0xff]
    %v117 = vld [vmem:[#allocation5 + $0x100] sm:$0xff]
    %v118 = vld [vmem:[#allocation5 + $0x108] sm:$0xff]
    %v119 = vld [vmem:[#allocation5 + $0x110] sm:$0xff]
    %v120 = vld [vmem:[#allocation5 + $0x118] sm:$0xff]
    %v121 = vld [vmem:[#allocation5 + $0x120] sm:$0xff]
    %v122 = vld [vmem:[#allocation5 + $0x128] sm:$0xff]
    %v123 = vld [vmem:[#allocation5 + $0x130] sm:$0xff]
    %v124 = vld [vmem:[#allocation5 + $0x138] sm:$0xff]
    %v125 = vld [vmem:[#allocation5 + $0x140] sm:$0xff]
    %v126 = vld [vmem:[#allocation5 + $0x148] sm:$0xff]
    %v127 = vld [vmem:[#allocation5 + $0x150] sm:$0xff]
    %v128 = vld [vmem:[#allocation5 + $0x158] sm:$0xff]
    %v129 = vld [vmem:[#allocation5 + $0x160] sm:$0xff]
    %v130 = vld [vmem:[#allocation5 + $0x168] sm:$0xff]
    %v131 = vld [vmem:[#allocation5 + $0x170] sm:$0xff]
    %v132 = vld [vmem:[#allocation5 + $0x178] sm:$0xff]
    %v133 = vld [vmem:[#allocation5 + $0x180] sm:$0xff]
    %v134 = vld [vmem:[#allocation5 + $0x188] sm:$0xff]
    %v135 = vld [vmem:[#allocation5 + $0x190] sm:$0xff]
    %v136 = vld [vmem:[#allocation5 + $0x198] sm:$0xff]
    %v137 = vld [vmem:[#allocation5 + $0x1a0] sm:$0xff]
    %v138 = vld [vmem:[#allocation5 + $0x1a8] sm:$0xff]
    %v139 = vld [vmem:[#allocation5 + $0x1b0] sm:$0xff]
    %v140 = vld [vmem:[#allocation5 + $0x1b8] sm:$0xff]
    %v141 = vld [vmem:[#allocation5 + $0x1c0] sm:$0xff]
    %v142 = vld [vmem:[#allocation5 + $0x1c8] sm:$0xff]
    %v143 = vld [vmem:[#allocation5 + $0x1d0] sm:$0xff]
    %v144 = vld [vmem:[#allocation5 + $0x1d8] sm:$0xff]
    %v145 = vld [vmem:[#allocation5 + $0x1e0] sm:$0xff]
    %v146 = vld [vmem:[#allocation5 + $0x1e8] sm:$0xff]
    %v147 = vld [vmem:[#allocation5 + $0x1f0] sm:$0xff]
    %v148 = vld [vmem:[#allocation5 + $0x1f8] sm:$0xff]
    %v149 = vld [vmem:[#allocation5 + $0x200] sm:$0xff]
    %v150 = vld [vmem:[#allocation5 + $0x208] sm:$0xff]
    %v151 = vld [vmem:[#allocation5 + $0x210] sm:$0xff]
    %v152 = vld [vmem:[#allocation5 + $0x218] sm:$0xff]
    %v153 = vld [vmem:[#allocation5 + $0x220] sm:$0xff]
    %v154 = vld [vmem:[#allocation5 + $0x228] sm:$0xff]
    %v155 = vld [vmem:[#allocation5 + $0x230] sm:$0xff]
    %v156 = vld [vmem:[#allocation5 + $0x238] sm:$0xff]
    %v157 = vld [vmem:[#allocation5 + $0x240] sm:$0xff]
    %v158 = vld [vmem:[#allocation5 + $0x248] sm:$0xff]
    %v159 = vld [vmem:[#allocation5 + $0x250] sm:$0xff]
    %v160 = vld [vmem:[#allocation5 + $0x258] sm:$0xff]
    %v161 = vld [vmem:[#allocation5 + $0x260] sm:$0xff]
    %v162 = vld [vmem:[#allocation5 + $0x268] sm:$0xff]
    %v163 = vld [vmem:[#allocation5 + $0x270] sm:$0xff]
    %v164 = vld [vmem:[#allocation5 + $0x278] sm:$0xff]
    %v165 = vld [vmem:[#allocation5 + $0x280] sm:$0xff]
    %v166 = vld [vmem:[#allocation5 + $0x288] sm:$0xff]
    %v167 = vld [vmem:[#allocation5 + $0x290] sm:$0xff]
    %v168 = vld [vmem:[#allocation5 + $0x298] sm:$0xff]
    %v169 = vld [vmem:[#allocation5 + $0x2a0] sm:$0xff]
    %v170 = vld [vmem:[#allocation5 + $0x2a8] sm:$0xff]
    %v171 = vld [vmem:[#allocation5 + $0x2b0] sm:$0xff]
    %v172 = vld [vmem:[#allocation5 + $0x2b8] sm:$0xff]
    %v173 = vld [vmem:[#allocation5 + $0x2c0] sm:$0xff]
    %v174 = vld [vmem:[#allocation5 + $0x2c8] sm:$0xff]
    %v175 = vld [vmem:[#allocation5 + $0x2d0] sm:$0xff]
    %v176 = vld [vmem:[#allocation5 + $0x2d8] sm:$0xff]
    %v177 = vld [vmem:[#allocation5 + $0x2e0] sm:$0xff]
    %v178 = vld [vmem:[#allocation5 + $0x2e8] sm:$0xff]
    %v179 = vld [vmem:[#allocation5 + $0x2f0] sm:$0xff]
    %v180 = vld [vmem:[#allocation5 + $0x2f8] sm:$0xff]
    %v181 = vld [vmem:[#allocation5 + $0x300] sm:$0xff]
    %v182 = vld [vmem:[#allocation5 + $0x308] sm:$0xff]
    %v183 = vld [vmem:[#allocation7] sm:$0x3]
    %v185 = vperm.slane %v183, 0
    %v186 = vperm.slane %v183, 1
    %v193 = vunpack.c.l.b16 %v81
    %v194 = vunpack.c.h.b16 %v81
    %v195 = vunpack.c.l.b16 %v82
    %v196 = vunpack.c.h.b16 %v82
    %v197 = vunpack.c.l.b16 %v83
    %v198 = vunpack.c.h.b16 %v83
    %v199 = vunpack.c.l.b16 %v84
    %v200 = vpack.c.b16 %v193, %v193
    %v201 = vpack.c.b16 %v194, %v194
    %v202 = vpack.c.b16 %v195, %v195
    %v203 = vpack.c.b16 %v196, %v196
    %v204 = vpack.c.b16 %v197, %v197
    %v205 = vpack.c.b16 %v198, %v198
    %v206 = vpack.c.b16 %v199, %v199
    %v311 = vunpack.c.l.b16 %v85
    %v312 = vunpack.c.h.b16 %v85
    %v313 = vunpack.c.l.b16 %v86
    %v314 = vunpack.c.h.b16 %v86
    %v315 = vunpack.c.l.b16 %v87
    %v316 = vunpack.c.h.b16 %v87
    %v317 = vunpack.c.l.b16 %v88
    %v318 = vunpack.c.h.b16 %v88
    %v319 = vunpack.c.l.b16 %v89
    %v320 = vunpack.c.h.b16 %v89
    %v321 = vunpack.c.l.b16 %v90
    %v322 = vunpack.c.h.b16 %v90
    %v323 = vunpack.c.l.b16 %v91
    %v324 = vunpack.c.h.b16 %v91
    %v325 = vunpack.c.l.b16 %v92
    %v326 = vunpack.c.h.b16 %v92
    %v327 = vunpack.c.l.b16 %v93
    %v328 = vunpack.c.h.b16 %v93
    %v329 = vunpack.c.l.b16 %v94
    %v330 = vunpack.c.h.b16 %v94
    %v331 = vunpack.c.l.b16 %v95
    %v332 = vunpack.c.h.b16 %v95
    %v333 = vunpack.c.l.b16 %v96
    %v334 = vunpack.c.h.b16 %v96
    %v335 = vunpack.c.l.b16 %v97
    %v336 = vunpack.c.h.b16 %v97
    %v337 = vunpack.c.l.b16 %v98
    %v338 = vunpack.c.h.b16 %v98
    %v339 = vunpack.c.l.b16 %v99
    %v340 = vunpack.c.h.b16 %v99
    %v341 = vunpack.c.l.b16 %v100
    %v342 = vunpack.c.h.b16 %v100
    %v343 = vunpack.c.l.b16 %v101
    %v344 = vunpack.c.h.b16 %v101
    %v345 = vunpack.c.l.b16 %v102
    %v346 = vunpack.c.h.b16 %v102
    %v347 = vunpack.c.l.b16 %v103
    %v348 = vunpack.c.h.b16 %v103
    %v349 = vunpack.c.l.b16 %v104
    %v350 = vunpack.c.h.b16 %v104
    %v351 = vunpack.c.l.b16 %v105
    %v352 = vunpack.c.h.b16 %v105
    %v353 = vunpack.c.l.b16 %v106
    %v354 = vunpack.c.h.b16 %v106
    %v355 = vunpack.c.l.b16 %v107
    %v356 = vunpack.c.h.b16 %v107
    %v357 = vunpack.c.l.b16 %v108
    %v358 = vunpack.c.h.b16 %v108
    %v359 = vunpack.c.l.b16 %v109
    %v360 = vunpack.c.h.b16 %v109
    %v361 = vunpack.c.l.b16 %v110
    %v362 = vunpack.c.h.b16 %v110
    %v363 = vunpack.c.l.b16 %v111
    %v364 = vunpack.c.h.b16 %v111
    %v365 = vunpack.c.l.b16 %v112
    %v366 = vunpack.c.h.b16 %v112
    %v367 = vunpack.c.l.b16 %v113
    %v368 = vunpack.c.h.b16 %v113
    %v369 = vunpack.c.l.b16 %v114
    %v370 = vunpack.c.h.b16 %v114
    %v371 = vunpack.c.l.b16 %v115
    %v372 = vunpack.c.h.b16 %v115
    %v373 = vunpack.c.l.b16 %v116
    %v374 = vunpack.c.h.b16 %v116
    %v375 = vunpack.c.l.b16 %v117
    %v376 = vunpack.c.h.b16 %v117
    %v377 = vunpack.c.l.b16 %v118
    %v378 = vunpack.c.h.b16 %v118
    %v379 = vunpack.c.l.b16 %v119
    %v380 = vunpack.c.h.b16 %v119
    %v381 = vunpack.c.l.b16 %v120
    %v382 = vunpack.c.h.b16 %v120
    %v383 = vunpack.c.l.b16 %v121
    %v384 = vunpack.c.h.b16 %v121
    %v385 = vunpack.c.l.b16 %v122
    %v386 = vunpack.c.h.b16 %v122
    %v387 = vunpack.c.l.b16 %v123
    %v388 = vunpack.c.h.b16 %v123
    %v389 = vunpack.c.l.b16 %v124
    %v390 = vunpack.c.h.b16 %v124
    %v391 = vunpack.c.l.b16 %v125
    %v392 = vunpack.c.h.b16 %v125
    %v393 = vunpack.c.l.b16 %v126
    %v394 = vunpack.c.h.b16 %v126
    %v395 = vunpack.c.l.b16 %v127
    %v396 = vunpack.c.h.b16 %v127
    %v397 = vunpack.c.l.b16 %v128
    %v398 = vunpack.c.h.b16 %v128
    %v399 = vunpack.c.l.b16 %v129
    %v400 = vunpack.c.h.b16 %v129
    %v401 = vunpack.c.l.b16 %v130
    %v402 = vunpack.c.h.b16 %v130
    %v403 = vunpack.c.l.b16 %v131
    %v404 = vunpack.c.h.b16 %v131
    %v405 = vunpack.c.l.b16 %v132
    %v406 = vunpack.c.h.b16 %v132
    %v407 = vunpack.c.l.b16 %v133
    %v408 = vunpack.c.h.b16 %v133
    %v409 = vunpack.c.l.b16 %v134
    %v410 = vunpack.c.h.b16 %v134
    %v411 = vunpack.c.l.b16 %v135
    %v412 = vunpack.c.h.b16 %v135
    %v413 = vunpack.c.l.b16 %v136
    %v414 = vunpack.c.h.b16 %v136
    %v415 = vunpack.c.l.b16 %v137
    %v416 = vunpack.c.h.b16 %v137
    %v417 = vunpack.c.l.b16 %v138
    %v418 = vunpack.c.h.b16 %v138
    %v419 = vunpack.c.l.b16 %v139
    %v420 = vunpack.c.h.b16 %v139
    %v421 = vunpack.c.l.b16 %v140
    %v422 = vunpack.c.h.b16 %v140
    %v423 = vunpack.c.l.b16 %v141
    %v424 = vunpack.c.h.b16 %v141
    %v425 = vunpack.c.l.b16 %v142
    %v426 = vunpack.c.h.b16 %v142
    %v427 = vunpack.c.l.b16 %v143
    %v428 = vunpack.c.h.b16 %v143
    %v429 = vunpack.c.l.b16 %v144
    %v430 = vunpack.c.h.b16 %v144
    %v431 = vunpack.c.l.b16 %v145
    %v432 = vunpack.c.h.b16 %v145
    %v433 = vunpack.c.l.b16 %v146
    %v434 = vunpack.c.h.b16 %v146
    %v435 = vunpack.c.l.b16 %v147
    %v436 = vunpack.c.h.b16 %v147
    %v437 = vunpack.c.l.b16 %v148
    %v438 = vunpack.c.h.b16 %v148
    %v439 = vunpack.c.l.b16 %v149
    %v440 = vunpack.c.h.b16 %v149
    %v441 = vunpack.c.l.b16 %v150
    %v442 = vunpack.c.h.b16 %v150
    %v443 = vunpack.c.l.b16 %v151
    %v444 = vunpack.c.h.b16 %v151
    %v445 = vunpack.c.l.b16 %v152
    %v446 = vunpack.c.h.b16 %v152
    %v447 = vunpack.c.l.b16 %v153
    %v448 = vunpack.c.h.b16 %v153
    %v449 = vunpack.c.l.b16 %v154
    %v450 = vunpack.c.h.b16 %v154
    %v451 = vunpack.c.l.b16 %v155
    %v452 = vunpack.c.h.b16 %v155
    %v453 = vunpack.c.l.b16 %v156
    %v454 = vunpack.c.h.b16 %v156
    %v455 = vunpack.c.l.b16 %v157
    %v456 = vunpack.c.h.b16 %v157
    %v457 = vunpack.c.l.b16 %v158
    %v458 = vunpack.c.h.b16 %v158
    %v459 = vunpack.c.l.b16 %v159
    %v460 = vunpack.c.h.b16 %v159
    %v461 = vunpack.c.l.b16 %v160
    %v462 = vunpack.c.h.b16 %v160
    %v463 = vunpack.c.l.b16 %v161
    %v464 = vunpack.c.h.b16 %v161
    %v465 = vunpack.c.l.b16 %v162
    %v466 = vunpack.c.h.b16 %v162
    %v467 = vunpack.c.l.b16 %v163
    %v468 = vunpack.c.h.b16 %v163
    %v469 = vunpack.c.l.b16 %v164
    %v470 = vunpack.c.h.b16 %v164
    %v471 = vunpack.c.l.b16 %v165
    %v472 = vunpack.c.h.b16 %v165
    %v473 = vunpack.c.l.b16 %v166
    %v474 = vunpack.c.h.b16 %v166
    %v475 = vunpack.c.l.b16 %v167
    %v476 = vunpack.c.h.b16 %v167
    %v477 = vunpack.c.l.b16 %v168
    %v478 = vunpack.c.h.b16 %v168
    %v479 = vunpack.c.l.b16 %v169
    %v480 = vunpack.c.h.b16 %v169
    %v481 = vunpack.c.l.b16 %v170
    %v482 = vunpack.c.h.b16 %v170
    %v483 = vunpack.c.l.b16 %v171
    %v484 = vunpack.c.h.b16 %v171
    %v485 = vunpack.c.l.b16 %v172
    %v486 = vunpack.c.h.b16 %v172
    %v487 = vunpack.c.l.b16 %v173
    %v488 = vunpack.c.h.b16 %v173
    %v489 = vunpack.c.l.b16 %v174
    %v490 = vunpack.c.h.b16 %v174
    %v491 = vunpack.c.l.b16 %v175
    %v492 = vunpack.c.h.b16 %v175
    %v493 = vunpack.c.l.b16 %v176
    %v494 = vunpack.c.h.b16 %v176
    %v495 = vunpack.c.l.b16 %v177
    %v496 = vunpack.c.h.b16 %v177
    %v497 = vunpack.c.l.b16 %v178
    %v498 = vunpack.c.h.b16 %v178
    %v499 = vunpack.c.l.b16 %v179
    %v500 = vunpack.c.h.b16 %v179
    %v501 = vunpack.c.l.b16 %v180
    %v502 = vunpack.c.h.b16 %v180
    %v503 = vunpack.c.l.b16 %v181
    %v504 = vunpack.c.h.b16 %v181
    %v505 = vunpack.c.l.b16 %v182
    %v506 = vunpack.c.h.b16 %v182
    %v507 = vpack.c.b16 %v313, %v311
    %v508 = vpack.c.b16 %v314, %v312
    %v509 = vpack.c.b16 %v317, %v315
    %v510 = vpack.c.b16 %v318, %v316
    %v511 = vpack.c.b16 %v321, %v319
    %v512 = vpack.c.b16 %v322, %v320
    %v513 = vpack.c.b16 %v325, %v323
    %v514 = vpack.c.b16 %v326, %v324
    %v515 = vpack.c.b16 %v329, %v327
    %v516 = vpack.c.b16 %v330, %v328
    %v517 = vpack.c.b16 %v333, %v331
    %v518 = vpack.c.b16 %v334, %v332
    %v519 = vpack.c.b16 %v337, %v335
    %v520 = vpack.c.b16 %v338, %v336
    %v521 = vpack.c.b16 %v341, %v339
    %v522 = vpack.c.b16 %v342, %v340
    %v523 = vpack.c.b16 %v345, %v343
    %v524 = vpack.c.b16 %v346, %v344
    %v525 = vpack.c.b16 %v349, %v347
    %v526 = vpack.c.b16 %v350, %v348
    %v527 = vpack.c.b16 %v353, %v351
    %v528 = vpack.c.b16 %v354, %v352
    %v529 = vpack.c.b16 %v357, %v355
    %v530 = vpack.c.b16 %v358, %v356
    %v531 = vpack.c.b16 %v361, %v359
    %v532 = vpack.c.b16 %v362, %v360
    %v533 = vpack.c.b16 %v365, %v363
    %v534 = vpack.c.b16 %v366, %v364
    %v535 = vpack.c.b16 %v369, %v367
    %v536 = vpack.c.b16 %v370, %v368
    %v537 = vpack.c.b16 %v373, %v371
    %v538 = vpack.c.b16 %v374, %v372
    %v539 = vpack.c.b16 %v377, %v375
    %v540 = vpack.c.b16 %v378, %v376
    %v541 = vpack.c.b16 %v381, %v379
    %v542 = vpack.c.b16 %v382, %v380
    %v543 = vpack.c.b16 %v385, %v383
    %v544 = vpack.c.b16 %v386, %v384
    %v545 = vpack.c.b16 %v389, %v387
    %v546 = vpack.c.b16 %v390, %v388
    %v547 = vpack.c.b16 %v393, %v391
    %v548 = vpack.c.b16 %v394, %v392
    %v549 = vpack.c.b16 %v397, %v395
    %v550 = vpack.c.b16 %v398, %v396
    %v551 = vpack.c.b16 %v401, %v399
    %v552 = vpack.c.b16 %v402, %v400
    %v553 = vpack.c.b16 %v405, %v403
    %v554 = vpack.c.b16 %v406, %v404
    %v555 = vpack.c.b16 %v409, %v407
    %v556 = vpack.c.b16 %v410, %v408
    %v557 = vpack.c.b16 %v413, %v411
    %v558 = vpack.c.b16 %v414, %v412
    %v559 = vpack.c.b16 %v417, %v415
    %v560 = vpack.c.b16 %v418, %v416
    %v561 = vpack.c.b16 %v421, %v419
    %v562 = vpack.c.b16 %v422, %v420
    %v563 = vpack.c.b16 %v425, %v423
    %v564 = vpack.c.b16 %v426, %v424
    %v565 = vpack.c.b16 %v429, %v427
    %v566 = vpack.c.b16 %v430, %v428
    %v567 = vpack.c.b16 %v433, %v431
    %v568 = vpack.c.b16 %v434, %v432
    %v569 = vpack.c.b16 %v437, %v435
    %v570 = vpack.c.b16 %v438, %v436
    %v571 = vpack.c.b16 %v441, %v439
    %v572 = vpack.c.b16 %v442, %v440
    %v573 = vpack.c.b16 %v445, %v443
    %v574 = vpack.c.b16 %v446, %v444
    %v575 = vpack.c.b16 %v449, %v447
    %v576 = vpack.c.b16 %v450, %v448
    %v577 = vpack.c.b16 %v453, %v451
    %v578 = vpack.c.b16 %v454, %v452
    %v579 = vpack.c.b16 %v457, %v455
    %v580 = vpack.c.b16 %v458, %v456
    %v581 = vpack.c.b16 %v461, %v459
    %v582 = vpack.c.b16 %v462, %v460
    %v583 = vpack.c.b16 %v465, %v463
    %v584 = vpack.c.b16 %v466, %v464
    %v585 = vpack.c.b16 %v469, %v467
    %v586 = vpack.c.b16 %v470, %v468
    %v587 = vpack.c.b16 %v473, %v471
    %v588 = vpack.c.b16 %v474, %v472
    %v589 = vpack.c.b16 %v477, %v475
    %v590 = vpack.c.b16 %v478, %v476
    %v591 = vpack.c.b16 %v481, %v479
    %v592 = vpack.c.b16 %v482, %v480
    %v593 = vpack.c.b16 %v485, %v483
    %v594 = vpack.c.b16 %v486, %v484
    %v595 = vpack.c.b16 %v489, %v487
    %v596 = vpack.c.b16 %v490, %v488
    %v597 = vpack.c.b16 %v493, %v491
    %v598 = vpack.c.b16 %v494, %v492
    %v599 = vpack.c.b16 %v497, %v495
    %v600 = vpack.c.b16 %v498, %v496
    %v601 = vpack.c.b16 %v501, %v499
    %v602 = vpack.c.b16 %v502, %v500
    %v603 = vpack.c.b16 %v505, %v503
    %v604 = vpack.c.b16 %v506, %v504
    %vm703 = vcmask 130048
    %v705 = vsel %vm703, %v206, 0
    %707 = vmatpush.bf16.msra.mxu0 %v521
    %708 = vmatpush.bf16.msra.mxu0 %v519
    %709 = vmatpush.bf16.msra.mxu0 %v517
    %710 = vmatpush.bf16.msra.mxu0 %v515
    %711 = vmatpush.bf16.msra.mxu0 %v513
    %712 = vmatpush.bf16.msra.mxu0 %v511
    %713 = vmatpush.bf16.msra.mxu0 %v509
    %714 = vmatpush.bf16.msra.mxu0 %v507
    %715 = vmatmul.bf16.gmra.mxu0 %v200
    %v716 = vpop.f32.mrf.mxu0
    %v717 = vadd.f32 %v185, %v716
    %v718 = vpop.f32.mrf.mxu0
    %719 = vdwg.mxu0
    %720 = vmatpush.bf16.msra.mxu0 %v537
    %721 = vmatpush.bf16.msra.mxu0 %v535
    %722 = vmatpush.bf16.msra.mxu0 %v533
    %723 = vmatpush.bf16.msra.mxu0 %v531
    %724 = vmatpush.bf16.msra.mxu0 %v529
    %725 = vmatpush.bf16.msra.mxu0 %v527
    %726 = vmatpush.bf16.msra.mxu0 %v525
    %727 = vmatpush.bf16.msra.mxu0 %v523
    %728 = vmatmul.bf16.gmra.mxu0 %v201
    %v729 = vpop.f32.mrf.mxu0
    %v730 = vadd.f32 %v717, %v729
    %v731 = vpop.f32.mrf.mxu0
    %732 = vdwg.mxu0
    %733 = vmatpush.bf16.msra.mxu0 %v553
    %734 = vmatpush.bf16.msra.mxu0 %v551
    %735 = vmatpush.bf16.msra.mxu0 %v549
    %736 = vmatpush.bf16.msra.mxu0 %v547
    %737 = vmatpush.bf16.msra.mxu0 %v545
    %738 = vmatpush.bf16.msra.mxu0 %v543
    %739 = vmatpush.bf16.msra.mxu0 %v541
    %740 = vmatpush.bf16.msra.mxu0 %v539
    %741 = vmatmul.bf16.gmra.mxu0 %v202
    %v742 = vpop.f32.mrf.mxu0
    %v743 = vadd.f32 %v730, %v742
    %v744 = vpop.f32.mrf.mxu0
    %745 = vdwg.mxu0
    %746 = vmatpush.bf16.msra.mxu0 %v569
    %747 = vmatpush.bf16.msra.mxu0 %v567
    %748 = vmatpush.bf16.msra.mxu0 %v565
    %749 = vmatpush.bf16.msra.mxu0 %v563
    %750 = vmatpush.bf16.msra.mxu0 %v561
    %751 = vmatpush.bf16.msra.mxu0 %v559
    %752 = vmatpush.bf16.msra.mxu0 %v557
    %753 = vmatpush.bf16.msra.mxu0 %v555
    %754 = vmatmul.bf16.gmra.mxu0 %v203
    %v755 = vpop.f32.mrf.mxu0
    %v756 = vadd.f32 %v743, %v755
    %v757 = vpop.f32.mrf.mxu0
    %758 = vdwg.mxu0
    %759 = vmatpush.bf16.msra.mxu0 %v585
    %760 = vmatpush.bf16.msra.mxu0 %v583
    %761 = vmatpush.bf16.msra.mxu0 %v581
    %762 = vmatpush.bf16.msra.mxu0 %v579
    %763 = vmatpush.bf16.msra.mxu0 %v577
    %764 = vmatpush.bf16.msra.mxu0 %v575
    %765 = vmatpush.bf16.msra.mxu0 %v573
    %766 = vmatpush.bf16.msra.mxu0 %v571
    %767 = vmatmul.bf16.gmra.mxu0 %v204
    %v768 = vpop.f32.mrf.mxu0
    %v769 = vadd.f32 %v756, %v768
    %v770 = vpop.f32.mrf.mxu0
    %771 = vdwg.mxu0
    %772 = vmatpush.bf16.msra.mxu0 %v601
    %773 = vmatpush.bf16.msra.mxu0 %v599
    %774 = vmatpush.bf16.msra.mxu0 %v597
    %775 = vmatpush.bf16.msra.mxu0 %v595
    %776 = vmatpush.bf16.msra.mxu0 %v593
    %777 = vmatpush.bf16.msra.mxu0 %v591
    %778 = vmatpush.bf16.msra.mxu0 %v589
    %779 = vmatpush.bf16.msra.mxu0 %v587
    %780 = vmatmul.bf16.gmra.mxu0 %v205
    %v781 = vpop.f32.mrf.mxu0
    %v782 = vadd.f32 %v769, %v781
    %v783 = vpop.f32.mrf.mxu0
    %784 = vdwg.mxu0
    %785 = vmatpush.bf16.msra.mxu0 0
    %786 = vmatpush.bf16.msra.mxu0 0
    %787 = vmatpush.bf16.msra.mxu0 0
    %788 = vmatpush.bf16.msra.mxu0 0
    %789 = vmatpush.bf16.msra.mxu0 0
    %790 = vmatpush.bf16.msra.mxu0 0
    %791 = vmatpush.bf16.msra.mxu0 0
    %792 = vmatpush.bf16.msra.mxu0 %v603
    %793 = vmatmul.bf16.gmra.mxu0 %v705
    %v794 = vpop.f32.mrf.mxu0
    %v795 = vadd.f32 %v782, %v794
    %v796 = vpop.f32.mrf.mxu0
    %797 = vdwg.mxu0
    %798 = vmatpush.bf16.msra.mxu0 %v522
    %799 = vmatpush.bf16.msra.mxu0 %v520
    %800 = vmatpush.bf16.msra.mxu0 %v518
    %801 = vmatpush.bf16.msra.mxu0 %v516
    %802 = vmatpush.bf16.msra.mxu0 %v514
    %803 = vmatpush.bf16.msra.mxu0 %v512
    %804 = vmatpush.bf16.msra.mxu0 %v510
    %805 = vmatpush.bf16.msra.mxu0 %v508
    %806 = vmatmul.bf16.gmra.mxu0 %v200
    %v807 = vpop.f32.mrf.mxu0
    %v808 = vadd.f32 %v186, %v807
    %v809 = vpop.f32.mrf.mxu0
    %810 = vdwg.mxu0
    %811 = vmatpush.bf16.msra.mxu0 %v538
    %812 = vmatpush.bf16.msra.mxu0 %v536
    %813 = vmatpush.bf16.msra.mxu0 %v534
    %814 = vmatpush.bf16.msra.mxu0 %v532
    %815 = vmatpush.bf16.msra.mxu0 %v530
    %816 = vmatpush.bf16.msra.mxu0 %v528
    %817 = vmatpush.bf16.msra.mxu0 %v526
    %818 = vmatpush.bf16.msra.mxu0 %v524
    %819 = vmatmul.bf16.gmra.mxu0 %v201
    %v820 = vpop.f32.mrf.mxu0
    %v821 = vadd.f32 %v808, %v820
    %v822 = vpop.f32.mrf.mxu0
    %823 = vdwg.mxu0
    %824 = vmatpush.bf16.msra.mxu0 %v554
    %825 = vmatpush.bf16.msra.mxu0 %v552
    %826 = vmatpush.bf16.msra.mxu0 %v550
    %827 = vmatpush.bf16.msra.mxu0 %v548
    %828 = vmatpush.bf16.msra.mxu0 %v546
    %829 = vmatpush.bf16.msra.mxu0 %v544
    %830 = vmatpush.bf16.msra.mxu0 %v542
    %831 = vmatpush.bf16.msra.mxu0 %v540
    %832 = vmatmul.bf16.gmra.mxu0 %v202
    %v833 = vpop.f32.mrf.mxu0
    %v834 = vadd.f32 %v821, %v833
    %v835 = vpop.f32.mrf.mxu0
    %836 = vdwg.mxu0
    %837 = vmatpush.bf16.msra.mxu0 %v570
    %838 = vmatpush.bf16.msra.mxu0 %v568
    %839 = vmatpush.bf16.msra.mxu0 %v566
    %840 = vmatpush.bf16.msra.mxu0 %v564
    %841 = vmatpush.bf16.msra.mxu0 %v562
    %842 = vmatpush.bf16.msra.mxu0 %v560
    %843 = vmatpush.bf16.msra.mxu0 %v558
    %844 = vmatpush.bf16.msra.mxu0 %v556
    %845 = vmatmul.bf16.gmra.mxu0 %v203
    %v846 = vpop.f32.mrf.mxu0
    %v847 = vadd.f32 %v834, %v846
    %v848 = vpop.f32.mrf.mxu0
    %849 = vdwg.mxu0
    %850 = vmatpush.bf16.msra.mxu0 %v586
    %851 = vmatpush.bf16.msra.mxu0 %v584
    %852 = vmatpush.bf16.msra.mxu0 %v582
    %853 = vmatpush.bf16.msra.mxu0 %v580
    %854 = vmatpush.bf16.msra.mxu0 %v578
    %855 = vmatpush.bf16.msra.mxu0 %v576
    %856 = vmatpush.bf16.msra.mxu0 %v574
    %857 = vmatpush.bf16.msra.mxu0 %v572
    %858 = vmatmul.bf16.gmra.mxu0 %v204
    %v859 = vpop.f32.mrf.mxu0
    %v860 = vadd.f32 %v847, %v859
    %v861 = vpop.f32.mrf.mxu0
    %862 = vdwg.mxu0
    %863 = vmatpush.bf16.msra.mxu0 %v602
    %864 = vmatpush.bf16.msra.mxu0 %v600
    %865 = vmatpush.bf16.msra.mxu0 %v598
    %866 = vmatpush.bf16.msra.mxu0 %v596
    %867 = vmatpush.bf16.msra.mxu0 %v594
    %868 = vmatpush.bf16.msra.mxu0 %v592
    %869 = vmatpush.bf16.msra.mxu0 %v590
    %870 = vmatpush.bf16.msra.mxu0 %v588
    %871 = vmatmul.bf16.gmra.mxu0 %v205
    %v872 = vpop.f32.mrf.mxu0
    %v873 = vadd.f32 %v860, %v872
    %v874 = vpop.f32.mrf.mxu0
    %875 = vdwg.mxu0
    %876 = vmatpush.bf16.msra.mxu0 0
    %877 = vmatpush.bf16.msra.mxu0 0
    %878 = vmatpush.bf16.msra.mxu0 0
    %879 = vmatpush.bf16.msra.mxu0 0
    %880 = vmatpush.bf16.msra.mxu0 0
    %881 = vmatpush.bf16.msra.mxu0 0
    %882 = vmatpush.bf16.msra.mxu0 0
    %883 = vmatpush.bf16.msra.mxu0 %v604
    %884 = vmatmul.bf16.gmra.mxu0 %v705
    %v885 = vpop.f32.mrf.mxu0
    %v886 = vadd.f32 %v873, %v885
    %v887 = vpop.f32.mrf.mxu0
    %888 = vdwg.mxu0
    %v889 = vmax.f32 %v795, 0.0
    %v890 = vmax.f32 %v886, 0.0
    %v891 = vpack.c.bf16 %v889, %v889
    %v892 = vpack.c.bf16 %v890, %v890
    %v893 = vld [vmem:[#allocation8] sm:$0xf]
    %v894 = vld [vmem:[#allocation8 + $0x4] sm:$0xf]
    %v895 = vld [vmem:[#allocation8 + $0x8] sm:$0xf]
    %v896 = vld [vmem:[#allocation8 + $0xc] sm:$0xf]
    %v897 = vld [vmem:[#allocation8 + $0x10] sm:$0xf]
    %v898 = vld [vmem:[#allocation8 + $0x14] sm:$0xf]
    %v899 = vld [vmem:[#allocation8 + $0x18] sm:$0xf]
    %v900 = vld [vmem:[#allocation8 + $0x1c] sm:$0xf]
    %v901 = vld [vmem:[#allocation8 + $0x20] sm:$0xf]
    %v902 = vld [vmem:[#allocation8 + $0x24] sm:$0xf]
    %v903 = vld [vmem:[#allocation8 + $0x28] sm:$0xf]
    %v904 = vld [vmem:[#allocation8 + $0x2c] sm:$0xf]
    %v905 = vld [vmem:[#allocation8 + $0x30] sm:$0xf]
    %v906 = vld [vmem:[#allocation8 + $0x34] sm:$0xf]
    %v907 = vld [vmem:[#allocation8 + $0x38] sm:$0xf]
    %v908 = vld [vmem:[#allocation8 + $0x3c] sm:$0xf]
    %v909 = vld [vmem:[#allocation8 + $0x40] sm:$0xf]
    %v910 = vld [vmem:[#allocation8 + $0x44] sm:$0xf]
    %v911 = vld [vmem:[#allocation8 + $0x48] sm:$0xf]
    %v912 = vld [vmem:[#allocation8 + $0x4c] sm:$0xf]
    %v913 = vld [vmem:[#allocation8 + $0x50] sm:$0xf]
    %v914 = vld [vmem:[#allocation8 + $0x54] sm:$0xf]
    %v915 = vld [vmem:[#allocation8 + $0x58] sm:$0xf]
    %v916 = vld [vmem:[#allocation8 + $0x5c] sm:$0xf]
    %v917 = vld [vmem:[#allocation8 + $0x60] sm:$0xf]
    %v918 = vld [vmem:[#allocation8 + $0x64] sm:$0xf]
    %v919 = vld [vmem:[#allocation8 + $0x68] sm:$0xf]
    %v920 = vld [vmem:[#allocation8 + $0x6c] sm:$0xf]
    %v921 = vld [vmem:[#allocation8 + $0x70] sm:$0xf]
    %v922 = vld [vmem:[#allocation8 + $0x74] sm:$0xf]
    %v923 = vld [vmem:[#allocation8 + $0x78] sm:$0xf]
    %v924 = vld [vmem:[#allocation8 + $0x7c] sm:$0xf]
    %v925 = vld [vmem:[%s4] sm:$0x1]
    %v927 = vperm.slane %v925, 0
    %v961 = vunpack.c.l.b16 %v893
    %v962 = vunpack.c.l.b16 %v894
    %v963 = vunpack.c.l.b16 %v895
    %v964 = vunpack.c.l.b16 %v896
    %v965 = vunpack.c.l.b16 %v897
    %v966 = vunpack.c.l.b16 %v898
    %v967 = vunpack.c.l.b16 %v899
    %v968 = vunpack.c.l.b16 %v900
    %v969 = vunpack.c.l.b16 %v901
    %v970 = vunpack.c.l.b16 %v902
    %v971 = vunpack.c.l.b16 %v903
    %v972 = vunpack.c.l.b16 %v904
    %v973 = vunpack.c.l.b16 %v905
    %v974 = vunpack.c.l.b16 %v906
    %v975 = vunpack.c.l.b16 %v907
    %v976 = vunpack.c.l.b16 %v908
    %v977 = vunpack.c.l.b16 %v909
    %v978 = vunpack.c.l.b16 %v910
    %v979 = vunpack.c.l.b16 %v911
    %v980 = vunpack.c.l.b16 %v912
    %v981 = vunpack.c.l.b16 %v913
    %v982 = vunpack.c.l.b16 %v914
    %v983 = vunpack.c.l.b16 %v915
    %v984 = vunpack.c.l.b16 %v916
    %v985 = vunpack.c.l.b16 %v917
    %v986 = vunpack.c.l.b16 %v918
    %v987 = vunpack.c.l.b16 %v919
    %v988 = vunpack.c.l.b16 %v920
    %v989 = vunpack.c.l.b16 %v921
    %v990 = vunpack.c.l.b16 %v922
    %v991 = vunpack.c.l.b16 %v923
    %v992 = vunpack.c.l.b16 %v924
    %v993 = vpack.c.b16 %v962, %v961
    %v994 = vpack.c.b16 %v964, %v963
    %v995 = vpack.c.b16 %v966, %v965
    %v996 = vpack.c.b16 %v968, %v967
    %v997 = vpack.c.b16 %v970, %v969
    %v998 = vpack.c.b16 %v972, %v971
    %v999 = vpack.c.b16 %v974, %v973
    %v1000 = vpack.c.b16 %v976, %v975
    %v1001 = vpack.c.b16 %v978, %v977
    %v1002 = vpack.c.b16 %v980, %v979
    %v1003 = vpack.c.b16 %v982, %v981
    %v1004 = vpack.c.b16 %v984, %v983
    %v1005 = vpack.c.b16 %v986, %v985
    %v1006 = vpack.c.b16 %v988, %v987
    %v1007 = vpack.c.b16 %v990, %v989
    %v1008 = vpack.c.b16 %v992, %v991
    %1025 = vmatpush.bf16.msra.mxu0 %v1000
    %1026 = vmatpush.bf16.msra.mxu0 %v999
    %1027 = vmatpush.bf16.msra.mxu0 %v998
    %1028 = vmatpush.bf16.msra.mxu0 %v997
    %1029 = vmatpush.bf16.msra.mxu0 %v996
    %1030 = vmatpush.bf16.msra.mxu0 %v995
    %1031 = vmatpush.bf16.msra.mxu0 %v994
    %1032 = vmatpush.bf16.msra.mxu0 %v993
    %1033 = vmatmul.bf16.gmra.mxu0 %v891
    %v1034 = vpop.f32.mrf.mxu0
    %v1035 = vadd.f32 %v927, %v1034
    %v1036 = vpop.f32.mrf.mxu0
    %1037 = vdwg.mxu0
    %1038 = vmatpush.bf16.msra.mxu0 %v1008
    %1039 = vmatpush.bf16.msra.mxu0 %v1007
    %1040 = vmatpush.bf16.msra.mxu0 %v1006
    %1041 = vmatpush.bf16.msra.mxu0 %v1005
    %1042 = vmatpush.bf16.msra.mxu0 %v1004
    %1043 = vmatpush.bf16.msra.mxu0 %v1003
    %1044 = vmatpush.bf16.msra.mxu0 %v1002
    %1045 = vmatpush.bf16.msra.mxu0 %v1001
    %1046 = vmatmul.bf16.gmra.mxu0 %v892
    %v1047 = vpop.f32.mrf.mxu0
    %v1048 = vadd.f32 %v1035, %v1047
    %v1049 = vpop.f32.mrf.mxu0
    %1050 = vdwg.mxu0
    %1051 = vst [vmem:[#allocation10] sm:$0xff] %v1048
    // Predicated region
    $region38: #{tpu_custom_call.1} parent=1 // pred_check
      _
    $region39: #{tpu_custom_call.1} parent=1 // pred_check_branch
      %1053 = sbr.rel (0) target = $region41
    $region40: #{tpu_custom_call.1} parent=1 // pred_region
      %1055 = vsyncadd [#allocation4], 0
      %s1057 = sshll.u32 [#allocation10], 4
      %s1058 = int_to_ptr.vmem [resolvable:$true] %s1057
      %s1059 = sshll.u32 %s5, 4
      %s1060 = int_to_ptr.hbm [resolvable:$true] %s1059
      %1062 = dma.vmem_to_hbm [thread:$0]  %s1058, 128, %s1060, [#allocation4]
    $region41: #{tpu_custom_call.1} parent=1 // pred_fallthru
      _
    // Predicated region
    $region42: #{tpu_custom_call.1} parent=1 // pred_check
      _
    $region43: #{tpu_custom_call.1} parent=1 // pred_check_branch
      %1064 = sbr.rel (0) target = $region45
    $region44: #{tpu_custom_call.1} parent=1 // pred_region
      %1066 = dma.done [#allocation4], 128
    $region45: #{tpu_custom_call.1} parent=1 // pred_fallthru
      _
    %1067 = vsyncpa [#allocation3], 1
    %1068 = vsyncpa [#allocation6], 1
    %1069 = vsyncpa [#allocation9], 1
    %1070 = vsyncpa [#allocation4], 1

</llo_original>
